<compile_context>
chip_gen: v7x
topology: tpu7x:2x2x1
jax: 0.10.0
libtpu: 0.0.40
codegen_flags: <defaults>
</compile_context>

<pallas_src>
import jax
import jax.numpy as jnp
import numpy as np
from jax.experimental import pallas as pl
from jax.experimental.pallas import tpu as pltpu

_MAX_CAM_BLOCK = 1 << 16  # (6+16) lanes * 4 B * 2 buffers * 65536 ~= 11.5 MiB VMEM


def _c2w_kernel(r_ref, t_ref, o_ref):
    """r_ref: (3, N) f32, t_ref: (3, N) f32, o_ref: (16, N) f32.

    Cameras on lanes; row j of o_ref is entry j of the row-major 4x4 c2w.
    """
    rx = r_ref[0:1, :]
    ry = r_ref[1:2, :]
    rz = r_ref[2:3, :]
    tx = t_ref[0:1, :]
    ty = t_ref[1:2, :]
    tz = t_ref[2:3, :]

    xx, yy, zz = rx * rx, ry * ry, rz * rz
    xy, xz, yz = rx * ry, rx * rz, ry * rz

    # |r| + eps and Rodrigues coefficients (sqrt/sin/cos go to the EUP).
    norm = jnp.sqrt(xx + yy + zz) + 1e-15
    inv_n = 1.0 / norm
    a = jnp.sin(norm) * inv_n                      # sin(|r|)/|r|
    b = (1.0 - jnp.cos(norm)) * (inv_n * inv_n)    # (1-cos(|r|))/|r|^2

    # R = I + a*K + b*K^2, expanded elementwise (3x3: not MXU-worthy).
    r00 = 1.0 - b * (yy + zz)
    r01 = b * xy - a * rz
    r02 = b * xz + a * ry
    r10 = b * xy + a * rz
    r11 = 1.0 - b * (xx + zz)
    r12 = b * yz - a * rx
    r20 = b * xz - a * ry
    r21 = b * yz + a * rx
    r22 = 1.0 - b * (xx + yy)

    zero = jnp.zeros_like(rx)
    one = jnp.ones_like(rx)

    # Single sublane-concat + one unmasked, lane-dense full-tile store.
    o_ref[...] = jnp.concatenate(
        [r00, r01, r02, tx,
         r10, r11, r12, ty,
         r20, r21, r22, tz,
         zero, zero, zero, one],
        axis=0,
    )


def _round_up(x, m):
    return ((x + m - 1) // m) * m


def _c2w_lane_major(r_t, t_t, cam_block, grid_steps):
    """r_t, t_t: (3, padded) f32 (cameras on lanes) -> (16, padded) f32."""
    return pl.pallas_call(
        _c2w_kernel,
        out_shape=jax.ShapeDtypeStruct((16, r_t.shape[1]), jnp.float32),
        grid=(grid_steps,),
        in_specs=[
            pl.BlockSpec((3, cam_block), lambda i: (0, i)),
            pl.BlockSpec((3, cam_block), lambda i: (0, i)),
        ],
        out_specs=pl.BlockSpec((16, cam_block), lambda i: (0, i)),
        compiler_params=pltpu.CompilerParams(
            dimension_semantics=("parallel",)),  # shards cams on v7x's 2 TCs
    )(r_t, t_t)


def learn_pose_all(r_params, t_params, cam_block=None):
    """c2w for ALL cameras in one pallas_call -> (num_cams, 4, 4) f32."""
    num_cams = r_params.shape[0]
    r_t = jnp.asarray(r_params, jnp.float32).T   # (3, num_cams), cams on lanes
    t_t = jnp.asarray(t_params, jnp.float32).T

    if cam_block is None:
        if num_cams >= 512:
            # ~2 lane-aligned blocks so v7x's two TensorCores both get work.
            cam_block = _round_up(-(-num_cams // 2), 128)
        else:
            cam_block = num_cams
    cam_block = min(cam_block, _MAX_CAM_BLOCK)

    if cam_block >= num_cams:
        # Single block == full array dims: no (8,128) constraint, no padding.
        cam_block = num_cams
        padded = num_cams
    else:
        # Multi-block: lane dim of the block must be a multiple of 128.
        cam_block = _round_up(cam_block, 128)
        padded = _round_up(num_cams, cam_block)
        pad = padded - num_cams
        if pad:
            # Zero rotation rows -> identity R (a~1, b~0); padding is harmless.
            r_t = jnp.pad(r_t, ((0, 0), (0, pad)))
            t_t = jnp.pad(t_t, ((0, 0), (0, pad)))

    out = _c2w_lane_major(r_t, t_t, cam_block, padded // cam_block)
    return out[:, :num_cams].T.reshape(num_cams, 4, 4)


def learn_pose_forward(r_params, t_params, cam_id, cam_block=None):
    """LearnPose.forward(cam_id) -> (4, 4) c2w.

    The kernel is batched over all cameras (launch overhead dominates this
    op); a single cam_id forward slices the batched result.
    """
    return learn_pose_all(r_params, t_params, cam_block=cam_block)[cam_id]


def _reference_c2w(r_vec, t_vec):
    """Pure-JAX reference identical to the PyTorch make_c2w."""
    zero = jnp.zeros((1,), jnp.float32)
    k0 = jnp.concatenate([zero, -r_vec[2:3], r_vec[1:2]])
    k1 = jnp.concatenate([r_vec[2:3], zero, -r_vec[0:1]])
    k2 = jnp.concatenate([-r_vec[1:2], r_vec[0:1], zero])
    K = jnp.stack([k0, k1, k2], axis=0)
    norm = jnp.sqrt(jnp.sum(r_vec * r_vec)) + 1e-15
    R = (jnp.eye(3, dtype=jnp.float32)
         + jnp.sin(norm) / norm * K
         + (1.0 - jnp.cos(norm)) / (norm ** 2) * (K @ K))
    top = jnp.concatenate([R, t_vec[:, None]], axis=1)
    bottom = jnp.array([[0.0, 0.0, 0.0, 1.0]], jnp.float32)
    return jnp.concatenate([top, bottom], axis=0)


if __name__ == "__main__":
    key = jax.random.PRNGKey(0)

    # --- small case: 13 cams, single full-array block, no padding ---
    num_cams = 13
    kr, kt = jax.random.split(key)
    r_params = 0.1 * jax.random.normal(kr, (num_cams, 3), dtype=jnp.float32)
    t_params = 0.1 * jax.random.normal(kt, (num_cams, 3), dtype=jnp.float32)

    all_c2w = jax.block_until_ready(learn_pose_all(r_params, t_params))
    for cid in range(num_cams):
        ref = _reference_c2w(r_params[cid], t_params[cid])
        np.testing.assert_allclose(np.asarray(all_c2w[cid]), np.asarray(ref),
                                   rtol=1e-5, atol=1e-6)

    # forward(cam_id) semantics.
    cam_id = 3
    c2w = jax.block_until_ready(learn_pose_forward(r_params, t_params, cam_id))
    ref = _reference_c2w(r_params[cam_id], t_params[cam_id])
    np.testing.assert_allclose(np.asarray(c2w), np.asarray(ref),
                               rtol=1e-5, atol=1e-6)

    # --- multi-block + lane-padding path (cam_block=128, grid>1) ---
    num_cams2 = 300
    kr2, kt2 = jax.random.split(jax.random.PRNGKey(1))
    r2 = 0.1 * jax.random.normal(kr2, (num_cams2, 3), dtype=jnp.float32)
    t2 = 0.1 * jax.random.normal(kt2, (num_cams2, 3), dtype=jnp.float32)
    all2 = jax.block_until_ready(learn_pose_all(r2, t2, cam_block=128))
    for cid in (0, 127, 128, num_cams2 - 1):
        ref = _reference_c2w(r2[cid], t2[cid])
        np.testing.assert_allclose(np.asarray(all2[cid]), np.asarray(ref),
                                   rtol=1e-5, atol=1e-6)

    print("KERNEL_OK")
</pallas_src>

<mosaic_0001>
module attributes {stable_mosaic.version = 11 : i64} {
  func.func @_c2w_kernel(%arg0: i32, %arg1: memref<3x13xf32, #tpu.memory_space<vmem>>, %arg2: memref<3x13xf32, #tpu.memory_space<vmem>>, %arg3: memref<16x13xf32, #tpu.memory_space<vmem>>) attributes {dimension_semantics = [#tpu.dimension_semantics<parallel>], iteration_bounds = array<i64: 1>, scalar_prefetch = 0 : i64, scratch_operands = 0 : i64, tpu.core_type = #tpu.core_type<tc>, window_params = [{transform_indices = @transform_0, window_bounds = array<i64: 3, 13>}, {transform_indices = @transform_1, window_bounds = array<i64: 3, 13>}, {transform_indices = @transform_2, window_bounds = array<i64: 16, 13>}]} {
    %c0 = arith.constant 0 : index
    %c0_0 = arith.constant 0 : index
    %0 = vector.load %arg1[%c0, %c0_0] : memref<3x13xf32, #tpu.memory_space<vmem>>, vector<1x13xf32>
    %c1 = arith.constant 1 : index
    %c0_1 = arith.constant 0 : index
    %1 = vector.load %arg1[%c1, %c0_1] : memref<3x13xf32, #tpu.memory_space<vmem>>, vector<1x13xf32>
    %c2 = arith.constant 2 : index
    %c0_2 = arith.constant 0 : index
    %2 = vector.load %arg1[%c2, %c0_2] : memref<3x13xf32, #tpu.memory_space<vmem>>, vector<1x13xf32>
    %c0_3 = arith.constant 0 : index
    %c0_4 = arith.constant 0 : index
    %3 = vector.load %arg2[%c0_3, %c0_4] : memref<3x13xf32, #tpu.memory_space<vmem>>, vector<1x13xf32>
    %c1_5 = arith.constant 1 : index
    %c0_6 = arith.constant 0 : index
    %4 = vector.load %arg2[%c1_5, %c0_6] : memref<3x13xf32, #tpu.memory_space<vmem>>, vector<1x13xf32>
    %c2_7 = arith.constant 2 : index
    %c0_8 = arith.constant 0 : index
    %5 = vector.load %arg2[%c2_7, %c0_8] : memref<3x13xf32, #tpu.memory_space<vmem>>, vector<1x13xf32>
    %6 = arith.mulf %0, %0 : vector<1x13xf32>
    %7 = arith.mulf %1, %1 : vector<1x13xf32>
    %8 = arith.mulf %2, %2 : vector<1x13xf32>
    %9 = arith.mulf %0, %1 : vector<1x13xf32>
    %10 = arith.mulf %0, %2 : vector<1x13xf32>
    %11 = arith.mulf %1, %2 : vector<1x13xf32>
    %12 = arith.addf %6, %7 : vector<1x13xf32>
    %13 = arith.addf %12, %8 : vector<1x13xf32>
    %14 = math.sqrt %13 : vector<1x13xf32>
    %cst = arith.constant 1.000000e-15 : f32
    %15 = vector.broadcast %cst : f32 to vector<1x13xf32>
    %16 = arith.addf %14, %15 : vector<1x13xf32>
    %cst_9 = arith.constant 1.000000e+00 : f32
    %17 = vector.broadcast %cst_9 : f32 to vector<1x13xf32>
    %18 = arith.divf %17, %16 : vector<1x13xf32>
    %19 = math.sin %16 : vector<1x13xf32>
    %20 = arith.mulf %19, %18 : vector<1x13xf32>
    %21 = math.cos %16 : vector<1x13xf32>
    %cst_10 = arith.constant 1.000000e+00 : f32
    %22 = vector.broadcast %cst_10 : f32 to vector<1x13xf32>
    %23 = arith.subf %22, %21 : vector<1x13xf32>
    %24 = arith.mulf %18, %18 : vector<1x13xf32>
    %25 = arith.mulf %23, %24 : vector<1x13xf32>
    %26 = arith.addf %7, %8 : vector<1x13xf32>
    %27 = arith.mulf %25, %26 : vector<1x13xf32>
    %cst_11 = arith.constant 1.000000e+00 : f32
    %28 = vector.broadcast %cst_11 : f32 to vector<1x13xf32>
    %29 = arith.subf %28, %27 : vector<1x13xf32>
    %30 = arith.mulf %25, %9 : vector<1x13xf32>
    %31 = arith.mulf %20, %2 : vector<1x13xf32>
    %32 = arith.subf %30, %31 : vector<1x13xf32>
    %33 = arith.mulf %25, %10 : vector<1x13xf32>
    %34 = arith.mulf %20, %1 : vector<1x13xf32>
    %35 = arith.addf %33, %34 : vector<1x13xf32>
    %36 = arith.mulf %25, %9 : vector<1x13xf32>
    %37 = arith.mulf %20, %2 : vector<1x13xf32>
    %38 = arith.addf %36, %37 : vector<1x13xf32>
    %39 = arith.addf %6, %8 : vector<1x13xf32>
    %40 = arith.mulf %25, %39 : vector<1x13xf32>
    %cst_12 = arith.constant 1.000000e+00 : f32
    %41 = vector.broadcast %cst_12 : f32 to vector<1x13xf32>
    %42 = arith.subf %41, %40 : vector<1x13xf32>
    %43 = arith.mulf %25, %11 : vector<1x13xf32>
    %44 = arith.mulf %20, %0 : vector<1x13xf32>
    %45 = arith.subf %43, %44 : vector<1x13xf32>
    %46 = arith.mulf %25, %10 : vector<1x13xf32>
    %47 = arith.mulf %20, %1 : vector<1x13xf32>
    %48 = arith.subf %46, %47 : vector<1x13xf32>
    %49 = arith.mulf %25, %11 : vector<1x13xf32>
    %50 = arith.mulf %20, %0 : vector<1x13xf32>
    %51 = arith.addf %49, %50 : vector<1x13xf32>
    %52 = arith.addf %6, %7 : vector<1x13xf32>
    %53 = arith.mulf %25, %52 : vector<1x13xf32>
    %cst_13 = arith.constant 1.000000e+00 : f32
    %54 = vector.broadcast %cst_13 : f32 to vector<1x13xf32>
    %55 = arith.subf %54, %53 : vector<1x13xf32>
    %cst_14 = arith.constant 0.000000e+00 : f32
    %56 = vector.broadcast %cst_14 : f32 to vector<1x13xf32>
    %cst_15 = arith.constant 1.000000e+00 : f32
    %57 = vector.broadcast %cst_15 : f32 to vector<1x13xf32>
    %58 = tpu.concatenate %29, %32, %35, %3, %38, %42, %45, %4, %48, %51, %55, %5, %56, %56, %56, %57 in 0 : vector<1x13xf32>, vector<1x13xf32>, vector<1x13xf32>, vector<1x13xf32>, vector<1x13xf32>, vector<1x13xf32>, vector<1x13xf32>, vector<1x13xf32>, vector<1x13xf32>, vector<1x13xf32>, vector<1x13xf32>, vector<1x13xf32>, vector<1x13xf32>, vector<1x13xf32>, vector<1x13xf32>, vector<1x13xf32> -> vector<16x13xf32>
    %c0_16 = arith.constant 0 : index
    %c0_17 = arith.constant 0 : index
    %59 = vector.load %arg3[%c0_16, %c0_17] : memref<16x13xf32, #tpu.memory_space<vmem>>, vector<16x13xf32>
    tpu.vector_store %arg3[%c0_16, %c0_17], %58 {strides = array<i32>} : memref<16x13xf32, #tpu.memory_space<vmem>>, vector<16x13xf32>,
    return
  }
  func.func @transform_0(%arg0: i32) -> (i32, i32) {
    %c0_i32 = arith.constant 0 : i32
    %c0_i32_0 = arith.constant 0 : i32
    return %c0_i32, %arg0 : i32, i32
  }
  func.func @transform_1(%arg0: i32) -> (i32, i32) {
    %c0_i32 = arith.constant 0 : i32
    %c0_i32_0 = arith.constant 0 : i32
    return %c0_i32, %arg0 : i32, i32
  }
  func.func @transform_2(%arg0: i32) -> (i32, i32) {
    %c0_i32 = arith.constant 0 : i32
    %c0_i32_0 = arith.constant 0 : i32
    return %c0_i32, %arg0 : i32, i32
  }
}

</mosaic_0001>

<llo_original>
// kernel: tpu_custom_call.1
$region0: #{tpu_custom_call.1}
  #allocation0 [shape = 'u32[]', space=smem, size = 0x4, offset = 0x4, fixed_abs, tag = 'smem constant byte address 0x4 - core index']
  #allocation1 [shape = 'u32[144,128]{1,0:T(1,128)}', space=vmem, size = 0x12000, scoped, tag = 'internal scratch']
  %s0 = inlined_call_operand.hbm [shape: f32[3,13], index: 0, kind: input, shape index: {}]
  %s1 = inlined_call_operand.hbm [shape: f32[3,13], index: 1, kind: input, shape index: {}]
  %s2 = inlined_call_operand.hbm [shape: f32[16,13], index: 2, kind: output, shape index: {}]
  %s3 = sld [smem:[#allocation0]]
  $region26: #{tpu_custom_call.1} parent=0
    _
  %s5 = ssub.s32 1, %s3
  %s6 = scalar_select 0, %s5, %s3
  $region1: #{tpu_custom_call.1} parent=0
    #allocation2 [shape = 'u8[2048]{0}', space=vmem, size = 0x800, scoped, tag = 'input window, operand 0, single buffered']
    #allocation3 [shape = 's32[1]{0}', space=sflag, size = 0x4, scoped, tag = 'scoped memory for tpu_custom_call.1']
    #allocation4 [shape = 's32[1]{0}', space=sflag, size = 0x4, scoped, tag = 'scoped memory for tpu_custom_call.1']
    #allocation5 [shape = 'u8[2048]{0}', space=vmem, size = 0x800, scoped, tag = 'input window, operand 1, single buffered']
    #allocation6 [shape = 's32[1]{0}', space=sflag, size = 0x4, scoped, tag = 'scoped memory for tpu_custom_call.1']
    #allocation7 [shape = 'u8[8192]{0}', space=vmem, size = 0x2000, scoped, tag = 'output window, operand 0, single buffered']
    %7 = vsyncpa [#allocation3], 0
    %8 = vsyncpa [#allocation6], 0
    %9 = vsyncpa [#allocation4], 0
    // Predicated region
    $region2: #{tpu_custom_call.1} parent=1 // pred_check
      _
    $region3: #{tpu_custom_call.1} parent=1 // pred_check_branch
      %11 = sbr.rel (0) target = $region5
    $region4: #{tpu_custom_call.1} parent=1 // pred_region
      %s13 = ssub.s32 64, 64
      %14 = vsyncadd [#allocation3], %s13
      %s16 = sshll.u32 [#allocation2], 4
      %s17 = int_to_ptr.vmem [resolvable:$true] %s16
      %19 = dma.hbm_to_vmem [thread:$0]  %s0, 64, %s17, [#allocation3]
    $region5: #{tpu_custom_call.1} parent=1 // pred_fallthru
      _
    // Predicated region
    $region6: #{tpu_custom_call.1} parent=1 // pred_check
      _
    $region7: #{tpu_custom_call.1} parent=1 // pred_check_branch
      %21 = sbr.rel (0) target = $region9
    $region8: #{tpu_custom_call.1} parent=1 // pred_region
      %s23 = ssub.s32 64, 64
      %24 = vsyncadd [#allocation6], %s23
      %s26 = sshll.u32 [#allocation5], 4
      %s27 = int_to_ptr.vmem [resolvable:$true] %s26
      %29 = dma.hbm_to_vmem [thread:$0]  %s1, 64, %s27, [#allocation6]
    $region9: #{tpu_custom_call.1} parent=1 // pred_fallthru
      _
    // Predicated region
    $region10: #{tpu_custom_call.1} parent=1 // pred_check
      _
    $region11: #{tpu_custom_call.1} parent=1 // pred_check_branch
      %31 = sbr.rel (0) target = $region13
    $region12: #{tpu_custom_call.1} parent=1 // pred_region
      %32 = dma.done [#allocation3], 64
    $region13: #{tpu_custom_call.1} parent=1 // pred_fallthru
      _
    // Predicated region
    $region14: #{tpu_custom_call.1} parent=1 // pred_check
      _
    $region15: #{tpu_custom_call.1} parent=1 // pred_check_branch
      %34 = sbr.rel (0) target = $region17
    $region16: #{tpu_custom_call.1} parent=1 // pred_region
      %35 = dma.done [#allocation6], 64
    $region17: #{tpu_custom_call.1} parent=1 // pred_fallthru
      _
    %v36 = vld [vmem:[#allocation2] sm:$0x1]
    %v37 = vld [vmem:[#allocation2 + $0x1] sm:$0x1]
    %v38 = vld [vmem:[#allocation2 + $0x2] sm:$0x1]
    %v39 = vld [vmem:[#allocation5] sm:$0x1]
    %v40 = vld [vmem:[#allocation5 + $0x1] sm:$0x1]
    %v41 = vld [vmem:[#allocation5 + $0x2] sm:$0x1]
    %v42 = vmul.f32 %v36, %v36
    %v43 = vmul.f32 %v37, %v37
    %v44 = vmul.f32 %v38, %v38
    %v45 = vmul.f32 %v36, %v37
    %v46 = vmul.f32 %v36, %v38
    %v47 = vmul.f32 %v37, %v38
    %v48 = vadd.f32 %v42, %v43
    %v49 = vadd.f32 %v48, %v44
    %v50 = vrsqrt.pop %v49
    %v51 = vmul.f32 %v49, %v50
    %vm52 = vcmp.eq.f32.partialorder %v49, inf
    %v53 = vsel %vm52, %v49, %v51
    %vm54 = vcmp.eq.f32.partialorder %v49, 0.0
    %v55 = vand.u32 %v49, 2147483648
    %v56 = vsel %vm54, %v55, %v53
    %v57 = vadd.f32 %v56, 1e-15
    %v58 = vrcp.pop %v57
    %v59 = vmul.f32 1.0, %v58
    %v60 = vand.u32 2147483647, %v57
    %vm61 = vcmp.le.f32.partialorder %v60, 0.7853982
    %vm62 = vcmp.lt.s32.totalorder %v57, 0
    %v63 = vand.u32 %v57, 2139095040
    %v64 = vshrl.u32 %v63, 23
    %v65 = vsub.s32 %v64, 127
    %v66 = vand.u32 2147483647, %v57
    %v67 = vand.u32 %v66, 8388607
    %v68 = vor.u32 %v67, 8388608
    %v69 = vsub.s32 0, %v68
    %v70 = vadd.s32 %v65, 1
    %vm71 = vcmp.gt.s32.totalorder %v70, 0
    %v72 = vsel %vm71, %v70, 0
    %v73 = vshrl.u32 %v72, 5
    %v74 = vand.u32 %v72, 31
    %v75 = vsub.s32 32, %v74
    %v76 = vshrl.u32 683565275, %v75
    %v77 = vshll.u32 683565275, %v74
    %v78 = vshrl.u32 2475754826, %v75
    %v79 = vor.u32 %v77, %v78
    %v80 = vshll.u32 2475754826, %v74
    %v81 = vshrl.u32 2131351028, %v75
    %v82 = vor.u32 %v80, %v81
    %v83 = vshll.u32 2131351028, %v74
    %v84 = vshrl.u32 2102212464, %v75
    %v85 = vor.u32 %v83, %v84
    %v86 = vshll.u32 2102212464, %v74
    %v87 = vshrl.u32 920167782, %v75
    %v88 = vor.u32 %v86, %v87
    %v89 = vshll.u32 920167782, %v74
    %v90 = vshrl.u32 1326507024, %v75
    %v91 = vor.u32 %v89, %v90
    %vm92 = vcmp.lt.s32.totalorder %v73, 1
    %vm93 = vcmp.lt.s32.totalorder %v73, 2
    %vm94 = vcmp.lt.s32.totalorder %v73, 3
    %vm95 = vcmp.lt.s32.totalorder %v73, 4
    %v96 = vsel %vm92, %v76, %v79
    %v97 = vsel %vm95, %v85, 2102212464
    %v98 = vsel %vm94, %v82, %v97
    %v99 = vsel %vm93, %v96, %v98
    %v100 = vsel %vm92, %v79, %v82
    %v101 = vsel %vm95, %v88, 920167782
    %v102 = vsel %vm94, %v85, %v101
    %v103 = vsel %vm93, %v100, %v102
    %v104 = vsel %vm92, %v82, %v85
    %v105 = vsel %vm95, %v91, 1326507024
    %v106 = vsel %vm94, %v88, %v105
    %v107 = vsel %vm93, %v104, %v106
    %v108 = vshll.u32 %v68, 8
    %v109 = vmul.u32.u64.compose %v108, %v107
    %v110 = vextract.low.u32 %v109
    %v111 = vextract.high.u32 %v109
    %v112 = vmul.u32.u64.compose %v108, %v103
    %v113 = vextract.low.u32 %v112
    %v114 = vextract.high.u32 %v112
    %v115 = vmul.u32 %v108, %v99
    %v116 = vadd.s32 %v111, %v113
    %vm117 = vc.u32 %v111, %v113
    %v118 = vadd.s32 %v114, 1
    %v119 = vsel %vm117, %v118, %v114
    %v120 = vadd.s32 %v115, %v119
    %v121 = vadd.s32 %v120, 536870912
    %v122 = vshrl.u32 %v121, 30
    %v123 = vshll.u32 %v122, 30
    %v124 = vsub.s32 %v120, %v123
    %vm125 = vcmp.lt.s32.totalorder %v124, 0
    %v126 = vsub.s32 0, %v124
    %v127 = vsel %vm125, %v126, %v124
    %v128 = vclz %v127
    %v129 = vsub.s32 %v128, 2
    %vm130 = vcmp.gt.s32.totalorder 0, %v129
    %v131 = vsel %vm130, 0, %v129
    %v132 = vsub.s32 32, %v131
    %v133 = vshll.u32 %v124, %v131
    %v134 = vshrl.u32 %v116, %v132
    %v135 = vor.u32 %v133, %v134
    %v136 = vsub.s32 4294967266, %v131
    %v137 = vadd.s32 %v136, 127
    %v138 = vshll.u32 %v137, 23
    %v139 = vor.u32 4788187, %v138
    %v140 = vand.u32 2147483647, %v139
    %v142 = vcvt.s32.f32 %v135
    %v143 = vmul.f32 %v142, %v140
    %v144 = vxor.u32 %v143, 2147483648
    %v145 = vsel %vm62, %v144, %v143
    %v146 = vsub.s32 4, %v122
    %v147 = vsel %vm62, %v146, %v122
    %v148 = vsel %vm61, %v57, %v145
    %v149 = vsel %vm61, 0, %v147
    %v150 = vcosq.f32.pop %v148
    %v151 = vsinq.f32.pop %v148
    %vm152 = vweird.f32 %v57
    %v153 = vadd.s32 %v149, 3
    %v154 = vand.u32 %v153, 3
    %vm155 = vcmp.lt.s32.totalorder %v154, 2
    %vm156 = vcmp.eq.s32.totalorder %v154, 0
    %v157 = vxor.u32 %v151, 2147483648
    %v158 = vsel %vm156, %v150, %v157
    %vm159 = vcmp.eq.s32.totalorder %v154, 2
    %v160 = vxor.u32 %v150, 2147483648
    %v161 = vsel %vm159, %v160, %v151
    %v162 = vsel %vm155, %v158, %v161
    %v163 = vsel %vm152, nan, %v162
    %v164 = vmul.f32 %v163, %v59
    %v165 = vand.u32 2147483647, %v57
    %vm166 = vcmp.le.f32.partialorder %v165, 0.7853982
    %vm167 = vcmp.lt.s32.totalorder %v57, 0
    %v168 = vand.u32 %v57, 2139095040
    %v169 = vshrl.u32 %v168, 23
    %v170 = vsub.s32 %v169, 127
    %v171 = vand.u32 2147483647, %v57
    %v172 = vand.u32 %v171, 8388607
    %v173 = vor.u32 %v172, 8388608
    %v174 = vsub.s32 0, %v173
    %v175 = vadd.s32 %v170, 1
    %vm176 = vcmp.gt.s32.totalorder %v175, 0
    %v177 = vsel %vm176, %v175, 0
    %v178 = vshrl.u32 %v177, 5
    %v179 = vand.u32 %v177, 31
    %v180 = vsub.s32 32, %v179
    %v181 = vshrl.u32 683565275, %v180
    %v182 = vshll.u32 683565275, %v179
    %v183 = vshrl.u32 2475754826, %v180
    %v184 = vor.u32 %v182, %v183
    %v185 = vshll.u32 2475754826, %v179
    %v186 = vshrl.u32 2131351028, %v180
    %v187 = vor.u32 %v185, %v186
    %v188 = vshll.u32 2131351028, %v179
    %v189 = vshrl.u32 2102212464, %v180
    %v190 = vor.u32 %v188, %v189
    %v191 = vshll.u32 2102212464, %v179
    %v192 = vshrl.u32 920167782, %v180
    %v193 = vor.u32 %v191, %v192
    %v194 = vshll.u32 920167782, %v179
    %v195 = vshrl.u32 1326507024, %v180
    %v196 = vor.u32 %v194, %v195
    %vm197 = vcmp.lt.s32.totalorder %v178, 1
    %vm198 = vcmp.lt.s32.totalorder %v178, 2
    %vm199 = vcmp.lt.s32.totalorder %v178, 3
    %vm200 = vcmp.lt.s32.totalorder %v178, 4
    %v201 = vsel %vm197, %v181, %v184
    %v202 = vsel %vm200, %v190, 2102212464
    %v203 = vsel %vm199, %v187, %v202
    %v204 = vsel %vm198, %v201, %v203
    %v205 = vsel %vm197, %v184, %v187
    %v206 = vsel %vm200, %v193, 920167782
    %v207 = vsel %vm199, %v190, %v206
    %v208 = vsel %vm198, %v205, %v207
    %v209 = vsel %vm197, %v187, %v190
    %v210 = vsel %vm200, %v196, 1326507024
    %v211 = vsel %vm199, %v193, %v210
    %v212 = vsel %vm198, %v209, %v211
    %v213 = vshll.u32 %v173, 8
    %v214 = vmul.u32.u64.compose %v213, %v212
    %v215 = vextract.low.u32 %v214
    %v216 = vextract.high.u32 %v214
    %v217 = vmul.u32.u64.compose %v213, %v208
    %v218 = vextract.low.u32 %v217
    %v219 = vextract.high.u32 %v217
    %v220 = vmul.u32 %v213, %v204
    %v221 = vadd.s32 %v216, %v218
    %vm222 = vc.u32 %v216, %v218
    %v223 = vadd.s32 %v219, 1
    %v224 = vsel %vm222, %v223, %v219
    %v225 = vadd.s32 %v220, %v224
    %v226 = vadd.s32 %v225, 536870912
    %v227 = vshrl.u32 %v226, 30
    %v228 = vshll.u32 %v227, 30
    %v229 = vsub.s32 %v225, %v228
    %vm230 = vcmp.lt.s32.totalorder %v229, 0
    %v231 = vsub.s32 0, %v229
    %v232 = vsel %vm230, %v231, %v229
    %v233 = vclz %v232
    %v234 = vsub.s32 %v233, 2
    %vm235 = vcmp.gt.s32.totalorder 0, %v234
    %v236 = vsel %vm235, 0, %v234
    %v237 = vsub.s32 32, %v236
    %v238 = vshll.u32 %v229, %v236
    %v239 = vshrl.u32 %v221, %v237
    %v240 = vor.u32 %v238, %v239
    %v241 = vsub.s32 4294967266, %v236
    %v242 = vadd.s32 %v241, 127
    %v243 = vshll.u32 %v242, 23
    %v244 = vor.u32 4788187, %v243
    %v245 = vand.u32 2147483647, %v244
    %v247 = vcvt.s32.f32 %v240
    %v248 = vmul.f32 %v247, %v245
    %v249 = vxor.u32 %v248, 2147483648
    %v250 = vsel %vm167, %v249, %v248
    %v251 = vsub.s32 4, %v227
    %v252 = vsel %vm167, %v251, %v227
    %v253 = vsel %vm166, %v57, %v250
    %v254 = vsel %vm166, 0, %v252
    %v255 = vcosq.f32.pop %v253
    %v256 = vsinq.f32.pop %v253
    %vm257 = vweird.f32 %v57
    %v258 = vand.u32 %v254, 3
    %vm259 = vcmp.lt.s32.totalorder %v258, 2
    %vm260 = vcmp.eq.s32.totalorder %v258, 0
    %v261 = vxor.u32 %v256, 2147483648
    %v262 = vsel %vm260, %v255, %v261
    %vm263 = vcmp.eq.s32.totalorder %v258, 2
    %v264 = vxor.u32 %v255, 2147483648
    %v265 = vsel %vm263, %v264, %v256
    %v266 = vsel %vm259, %v262, %v265
    %v267 = vsel %vm257, nan, %v266
    %v268 = vsub.f32 1.0, %v267
    %v269 = vmul.f32 %v59, %v59
    %v270 = vmul.f32 %v268, %v269
    %v271 = vadd.f32 %v43, %v44
    %v272 = vmul.f32 %v270, %v271
    %v273 = vsub.f32 1.0, %v272
    %v274 = vmul.f32 %v270, %v45
    %v275 = vmul.f32 %v164, %v38
    %v276 = vsub.f32 %v274, %v275
    %v277 = vmul.f32 %v270, %v46
    %v278 = vmul.f32 %v164, %v37
    %v279 = vadd.f32 %v277, %v278
    %v280 = vadd.f32 %v274, %v275
    %v281 = vadd.f32 %v42, %v44
    %v282 = vmul.f32 %v270, %v281
    %v283 = vsub.f32 1.0, %v282
    %v284 = vmul.f32 %v270, %v47
    %v285 = vmul.f32 %v164, %v36
    %v286 = vsub.f32 %v284, %v285
    %v287 = vsub.f32 %v277, %v278
    %v288 = vadd.f32 %v284, %v285
    %v289 = vmul.f32 %v270, %v48
    %v290 = vsub.f32 1.0, %v289
    %v292 = vrot.slane %v276, 7
    %v295 = vrot.slane %v279, 6
    %v298 = vrot.slane %v39, 5
    %v301 = vrot.slane %v280, 4
    %v304 = vrot.slane %v283, 3
    %v307 = vrot.slane %v286, 2
    %v310 = vrot.slane %v40, 1
    %v313 = vrot.slane %v288, 7
    %v316 = vrot.slane %v290, 6
    %v319 = vrot.slane %v41, 5
    %vm321 = vcmask 1040384
    %v322 = vsel %vm321, %v273, %v292
    %vm323 = vcmask 1041408
    %v324 = vsel %vm323, %v322, %v295
    %vm325 = vcmask 1042432
    %v326 = vsel %vm325, %v324, %v298
    %vm327 = vcmask 1043456
    %v328 = vsel %vm327, %v326, %v301
    %vm329 = vcmask 1044480
    %v330 = vsel %vm329, %v328, %v304
    %vm331 = vcmask 1045504
    %v332 = vsel %vm331, %v330, %v307
    %vm333 = vcmask 1046528
    %v334 = vsel %vm333, %v332, %v310
    %v335 = vsel %vm321, %v287, %v313
    %v336 = vsel %vm323, %v335, %v316
    %v337 = vsel %vm325, %v336, %v319
    %v338 = vsel %vm327, %v337, 0.0
    %v339 = vsel %vm329, %v338, 0.0
    %v340 = vsel %vm331, %v339, 0.0
    %v341 = vsel %vm333, %v340, 1.0
    %vm342 = vcmask 105472
    %343 = vst.msk [vmem:[#allocation7] sm:$0xff] %vm342, %v334
    %344 = vst.msk [vmem:[#allocation7 + $0x8] sm:$0xff] %vm342, %v341
    // Predicated region
    $region18: #{tpu_custom_call.1} parent=1 // pred_check
      _
    $region19: #{tpu_custom_call.1} parent=1 // pred_check_branch
      %346 = sbr.rel (0) target = $region21
    $region20: #{tpu_custom_call.1} parent=1 // pred_region
      %s348 = ssub.s32 256, 256
      %349 = vsyncadd [#allocation4], %s348
      %s350 = sshll.u32 [#allocation7], 4
      %s351 = int_to_ptr.vmem [resolvable:$true] %s350
      %356 = dma.vmem_to_hbm [thread:$0]  %s351, 256, %s2, [#allocation4], 128, 128, 8
    $region21: #{tpu_custom_call.1} parent=1 // pred_fallthru
      _
    // Predicated region
    $region22: #{tpu_custom_call.1} parent=1 // pred_check
      _
    $region23: #{tpu_custom_call.1} parent=1 // pred_check_branch
      %358 = sbr.rel (0) target = $region25
    $region24: #{tpu_custom_call.1} parent=1 // pred_region
      %359 = dma.done [#allocation4], 256
    $region25: #{tpu_custom_call.1} parent=1 // pred_fallthru
      _
    %360 = vsyncpa [#allocation3], 1
    %361 = vsyncpa [#allocation6], 1
    %362 = vsyncpa [#allocation4], 1

</llo_original>
